<compile_context>
chip_gen: v7x
topology: tpu7x:2x2x1
jax: 0.10.0
libtpu: 0.0.40
codegen_flags: <defaults>
</compile_context>

<pallas_src>
import jax
import jax.numpy as jnp
from jax.experimental import pallas as pl
from jax.experimental.pallas import tpu as pltpu


# Row order inside the gathered [4, R, 128] feature slab.
_ROW_MAX_PODS, _ROW_MS, _ROW_PR, _ROW_PODS = 0, 1, 2, 3


def prot1_kernel(c_ref, feat_ref, o_ref):
    """feat_ref: [4, tile_r, 128] (max_pods, ms, pr, pods); o_ref: [tile_r, 128]."""
    c = c_ref[0]                          # scalar parameter, prefetched to SMEM

    max_pods = feat_ref[_ROW_MAX_PODS]    # [tile_r, 128]  (lane+sublane dense)
    ms       = feat_ref[_ROW_MS]
    pr       = feat_ref[_ROW_PR]
    pods     = feat_ref[_ROW_PODS]

    # Exact divide: DMA-bound kernel, so this costs nothing and matches the
    # reference exactly (no approx-reciprocal edge cases).
    o_ref[...] = (pods * pr * jnp.exp(ms - 1.0) + c) / max_pods - 0.5


def _choose_tile_r(r, cap):
    """Rows-of-128 per grid step: big tiles, but keep >=~8 steps for megacore."""
    t = max(8, min(cap, pl.cdiv(r, 8)))
    t = ((t + 7) // 8) * 8                # (8,128) sublane alignment
    if t >= r:
        return r                          # one block spanning the full array
    return t


def prot1_forward(x, c, *, max_tile_rows=1024):
    """x: [N, 7] float, c: [1] float -> [N, 1] float32."""
    n = x.shape[0]
    x = x.astype(jnp.float32)
    c = jnp.asarray(c, dtype=jnp.float32).reshape((1,))

    # Single fused XLA pass: gather the 4 used feature columns and put the
    # batch on the minor axis; the reshape to [4, R, 128] below is free.
    feat = jnp.stack([x[:, 1], x[:, 4], x[:, 5], x[:, 6]], axis=0)   # [4, N]

    r = pl.cdiv(n, 128)                       # rows of 128 batch elements
    tile_r = _choose_tile_r(r, max_tile_rows)
    r_pad = pl.cdiv(r, tile_r) * tile_r
    n_pad = r_pad * 128
    if n_pad != n:
        # Pad with ones (finite; padded rows are sliced off at the end). The
        # pad fuses into the same XLA pass as the gather above.
        feat = jnp.pad(feat, ((0, 0), (0, n_pad - n)), constant_values=1.0)
    feat = feat.reshape(4, r_pad, 128)        # free, row-major preserving

    grid = (r_pad // tile_r,)

    out = pl.pallas_call(
        prot1_kernel,
        out_shape=jax.ShapeDtypeStruct((r_pad, 128), jnp.float32),
        grid_spec=pltpu.PrefetchScalarGridSpec(
            num_scalar_prefetch=1,            # c -> SMEM scalar
            grid=grid,
            in_specs=[
                pl.BlockSpec((4, tile_r, 128), lambda i, c_ref: (0, i, 0)),
            ],
            out_specs=pl.BlockSpec((tile_r, 128), lambda i, c_ref: (i, 0)),
        ),
        compiler_params=pltpu.CompilerParams(
            dimension_semantics=("parallel",),
        ),
    )(c, feat)

    out = out.reshape(n_pad)
    if n_pad != n:
        out = out[:n]
    return out.reshape(n, 1)


def prot1_reference(x, c):
    """Pure-JAX reference mirroring the PyTorch forward."""
    x = x.astype(jnp.float32)
    max_pods = x[:, 1:2]
    ms = x[:, 4:5]
    pr = x[:, 5:6]
    pods = x[:, 6:7]
    return (pods * pr * jnp.exp(ms - 1.0) + c[0]) / max_pods - 0.5


if __name__ == "__main__":
    key = jax.random.PRNGKey(0)
    k1, k2 = jax.random.split(key)

    # Parameter c initialized to 1.0, as in the module's __init__.
    c = jnp.array([1.0], dtype=jnp.float32)

    # Small primary shape.
    N = 8
    x = jax.random.uniform(k1, (N, 7), dtype=jnp.float32, minval=0.5, maxval=2.0)
    out = jax.block_until_ready(prot1_forward(x, c))
    ref = prot1_reference(x, c)
    assert out.shape == (N, 1)
    assert jnp.allclose(out, ref, atol=1e-5, rtol=1e-5)

    # Second shape that exercises lane padding (N not a multiple of 128).
    N2 = 300
    x2 = jax.random.uniform(k2, (N2, 7), dtype=jnp.float32, minval=0.5, maxval=2.0)
    out2 = jax.block_until_ready(prot1_forward(x2, c))
    ref2 = prot1_reference(x2, c)
    assert out2.shape == (N2, 1)
    assert jnp.allclose(out2, ref2, atol=1e-5, rtol=1e-5)

    print("KERNEL_OK")
</pallas_src>

<mosaic_0001>
module attributes {stable_mosaic.version = 11 : i64} {
  func.func @prot1_kernel(%arg0: i32, %arg1: memref<1xf32, #tpu.memory_space<smem>>, %arg2: memref<4x1x128xf32, #tpu.memory_space<vmem>>, %arg3: memref<1x128xf32, #tpu.memory_space<vmem>>) attributes {dimension_semantics = [#tpu.dimension_semantics<parallel>], iteration_bounds = array<i64: 1>, scalar_prefetch = 1 : i64, scratch_operands = 0 : i64, tpu.core_type = #tpu.core_type<tc>, window_params = [{transform_indices = @transform_0, window_bounds = array<i64: 4, 1, 128>}, {transform_indices = @transform_1, window_bounds = array<i64: 1, 128>}]} {
    %c0 = arith.constant 0 : index
    %0 = memref.load %arg1[%c0] : memref<1xf32, #tpu.memory_space<smem>>
    %c0_0 = arith.constant 0 : index
    %c0_1 = arith.constant 0 : index
    %c0_2 = arith.constant 0 : index
    %1 = vector.load %arg2[%c0_0, %c0_1, %c0_2] : memref<4x1x128xf32, #tpu.memory_space<vmem>>, vector<1x1x128xf32>
    %2 = vector.shape_cast %1 : vector<1x1x128xf32> to vector<1x128xf32>
    %c1 = arith.constant 1 : index
    %c0_3 = arith.constant 0 : index
    %c0_4 = arith.constant 0 : index
    %3 = vector.load %arg2[%c1, %c0_3, %c0_4] : memref<4x1x128xf32, #tpu.memory_space<vmem>>, vector<1x1x128xf32>
    %4 = vector.shape_cast %3 : vector<1x1x128xf32> to vector<1x128xf32>
    %c2 = arith.constant 2 : index
    %c0_5 = arith.constant 0 : index
    %c0_6 = arith.constant 0 : index
    %5 = vector.load %arg2[%c2, %c0_5, %c0_6] : memref<4x1x128xf32, #tpu.memory_space<vmem>>, vector<1x1x128xf32>
    %6 = vector.shape_cast %5 : vector<1x1x128xf32> to vector<1x128xf32>
    %c3 = arith.constant 3 : index
    %c0_7 = arith.constant 0 : index
    %c0_8 = arith.constant 0 : index
    %7 = vector.load %arg2[%c3, %c0_7, %c0_8] : memref<4x1x128xf32, #tpu.memory_space<vmem>>, vector<1x1x128xf32>
    %8 = vector.shape_cast %7 : vector<1x1x128xf32> to vector<1x128xf32>
    %9 = arith.mulf %8, %6 : vector<1x128xf32>
    %cst = arith.constant 1.000000e+00 : f32
    %10 = vector.broadcast %cst : f32 to vector<1x128xf32>
    %11 = arith.subf %4, %10 : vector<1x128xf32>
    %12 = math.exp %11 : vector<1x128xf32>
    %13 = arith.mulf %9, %12 : vector<1x128xf32>
    %14 = vector.broadcast %0 : f32 to vector<1x128xf32>
    %15 = arith.addf %13, %14 : vector<1x128xf32>
    %16 = arith.divf %15, %2 : vector<1x128xf32>
    %cst_9 = arith.constant 5.000000e-01 : f32
    %17 = vector.broadcast %cst_9 : f32 to vector<1x128xf32>
    %18 = arith.subf %16, %17 : vector<1x128xf32>
    %c0_10 = arith.constant 0 : index
    %c0_11 = arith.constant 0 : index
    %19 = vector.load %arg3[%c0_10, %c0_11] : memref<1x128xf32, #tpu.memory_space<vmem>>, vector<1x128xf32>
    tpu.vector_store %arg3[%c0_10, %c0_11], %18 {strides = array<i32>} : memref<1x128xf32, #tpu.memory_space<vmem>>, vector<1x128xf32>,
    return
  }
  func.func @transform_0(%arg0: i32, %arg1: memref<1xf32, #tpu.memory_space<smem>>) -> (i32, i32, i32) {
    %c0_i32 = arith.constant 0 : i32
    %c0_i32_0 = arith.constant 0 : i32
    %c0_i32_1 = arith.constant 0 : i32
    return %c0_i32, %arg0, %c0_i32_0 : i32, i32, i32
  }
  func.func @transform_1(%arg0: i32, %arg1: memref<1xf32, #tpu.memory_space<smem>>) -> (i32, i32) {
    %c0_i32 = arith.constant 0 : i32
    %c0_i32_0 = arith.constant 0 : i32
    return %arg0, %c0_i32 : i32, i32
  }
}

</mosaic_0001>

<llo_original>
// kernel: tpu_custom_call.1
$region0: #{tpu_custom_call.1}
  #allocation0 [shape = 'u32[]', space=smem, size = 0x4, offset = 0x4, fixed_abs, tag = 'smem constant byte address 0x4 - core index']
  #allocation1 [shape = 'u32[144,128]{1,0:T(1,128)}', space=vmem, size = 0x12000, scoped, tag = 'internal scratch']
  #allocation2 [shape = 's32[1]{0}', space=sflag, size = 0x4, scoped, tag = 'scoped memory for tpu_custom_call.1']
  #allocation3 [shape = 'f32[1]{0:T(128)S(6)}', space=smem, size = 0x200, scoped, tag = 'prefetched SMEM operand 0']
  %s0 = inlined_call_operand.<no memory space> [shape: f32[1], index: 0, kind: input, shape index: {}]
  %s1 = inlined_call_operand.hbm [shape: f32[4,1,128], index: 1, kind: input, shape index: {}]
  %s2 = inlined_call_operand.hbm [shape: f32[1,128], index: 2, kind: output, shape index: {}]
  %s3 = sld [smem:[#allocation0]]
  $region18: #{tpu_custom_call.1} parent=0
    _
  %s5 = ssub.s32 1, %s3
  %s6 = scalar_select 0, %s5, %s3
  %7 = sst [smem:[#allocation3]] %s0
  $region1: #{tpu_custom_call.1} parent=0
    #allocation4 [shape = 'u8[2048]{0}', space=vmem, size = 0x800, scoped, tag = 'input window, operand 1, single buffered']
    #allocation5 [shape = 's32[1]{0}', space=sflag, size = 0x4, scoped, tag = 'scoped memory for tpu_custom_call.1']
    #allocation6 [shape = 's32[1]{0}', space=sflag, size = 0x4, scoped, tag = 'scoped memory for tpu_custom_call.1']
    #allocation7 [shape = 'u8[512]{0}', space=vmem, size = 0x400, scoped, tag = 'output window, operand 0, single buffered']
    %8 = vsyncpa [#allocation5], 0
    %9 = vsyncpa [#allocation6], 0
    // Predicated region
    $region2: #{tpu_custom_call.1} parent=1 // pred_check
      _
    $region3: #{tpu_custom_call.1} parent=1 // pred_check_branch
      %11 = sbr.rel (0) target = $region5
    $region4: #{tpu_custom_call.1} parent=1 // pred_region
      %s13 = ssub.s32 64, 64
      %14 = vsyncadd [#allocation5], %s13
      %s15 = sshll.u32 [#allocation4], 4
      %s16 = int_to_ptr.vmem [resolvable:$true] %s15
      %21 = dma.hbm_to_vmem [thread:$0]  %s1, 64, %s16, [#allocation5], 16, 16, 1
    $region5: #{tpu_custom_call.1} parent=1 // pred_fallthru
      _
    // Predicated region
    $region6: #{tpu_custom_call.1} parent=1 // pred_check
      _
    $region7: #{tpu_custom_call.1} parent=1 // pred_check_branch
      %23 = sbr.rel (0) target = $region9
    $region8: #{tpu_custom_call.1} parent=1 // pred_region
      %24 = dma.done [#allocation5], 64
    $region9: #{tpu_custom_call.1} parent=1 // pred_fallthru
      _
    %s25 = sld [smem:[#allocation3]]
    %v26 = vld [vmem:[#allocation4] sm:$0x1]
    %s27 = scalar_lea.vmem [#allocation4], 1
    %v28 = vld [vmem:[%s27] sm:$0x1]
    %s29 = scalar_lea.vmem [#allocation4], 2
    %v30 = vld [vmem:[%s29] sm:$0x1]
    %s31 = scalar_lea.vmem [#allocation4], 3
    %v32 = vld [vmem:[%s31] sm:$0x1]
    %v33 = vmul.f32 %v32, %v30
    %v34 = vsub.f32 %v28, 1.0
    %v35 = vmul.f32 %v34, 1.442695
    %v36 = vpow.pop %v35
    %v37 = vmul.f32 %v33, %v36
    %v38 = vstv %s25
    %v39 = vadd.f32 %v37, %v38
    %v40 = vrcp.pop %v26
    %v41 = vmul.f32 %v39, %v40
    %v42 = vsub.f32 %v41, 0.5
    %43 = vst [vmem:[#allocation7] sm:$0x1] %v42
    // Predicated region
    $region10: #{tpu_custom_call.1} parent=1 // pred_check
      _
    $region11: #{tpu_custom_call.1} parent=1 // pred_check_branch
      %45 = sbr.rel (0) target = $region13
    $region12: #{tpu_custom_call.1} parent=1 // pred_region
      %s47 = ssub.s32 16, 16
      %48 = vsyncadd [#allocation6], %s47
      %s50 = sshll.u32 [#allocation7], 4
      %s51 = int_to_ptr.vmem [resolvable:$true] %s50
      %53 = dma.vmem_to_hbm [thread:$0]  %s51, 16, %s2, [#allocation6]
    $region13: #{tpu_custom_call.1} parent=1 // pred_fallthru
      _
    // Predicated region
    $region14: #{tpu_custom_call.1} parent=1 // pred_check
      _
    $region15: #{tpu_custom_call.1} parent=1 // pred_check_branch
      %55 = sbr.rel (0) target = $region17
    $region16: #{tpu_custom_call.1} parent=1 // pred_region
      %56 = dma.done [#allocation6], 16
    $region17: #{tpu_custom_call.1} parent=1 // pred_fallthru
      _
    %57 = vsyncpa [#allocation5], 1
    %58 = vsyncpa [#allocation6], 1

</llo_original>
